<compile_context>
chip_gen: v5e
topology: v5e:2x2
jax: 0.10.0
libtpu: 0.0.40
codegen_flags: <defaults>
</compile_context>

<pallas_src>
import jax
import jax.numpy as jnp
import numpy as np
from jax.experimental import pallas as pl
from jax.experimental.pallas import tpu as pltpu

# ---------------------------- problem sizes ---------------------------------
VOCAB = 128        # vocab_size (small synthetic)
EMB = 32           # item embedding dim E  (4E = 128 -> one full lane tile)
HID = 32           # hidden dim H of similarity MLP (ai2v.W0 output)
N_NEGS = 10        # negatives per positive
BATCH = 2          # batch size (small demo run)
CTX = 8            # context items per user
T_ITEMS = 1 + N_NEGS   # targets per batch row


# ----------------------------- Pallas kernel ---------------------------------
def _sgns_loss_kernel(feat_ref, bias_ref, w0t_ref, b0_ref, w1_ref,
                      g_mask_ref, p_mask_ref, out_ref):
    """Similarity MLP + per-group softmax over T targets + NLL (one batch tile).

    feat_ref   : (tile_rows, 4E)      bf16  lane-dense feature slab
    bias_ref   : (tile_rows, 1)       f32   b_l_j[target] + W1 bias (folded)
    w0t_ref    : (4E, H)              bf16  W0 pre-transposed (torch weight is (H, 4E))
    b0_ref     : (1, H)               f32
    w1_ref     : (1, H)               f32
    g_mask_ref : (tile_rows, tile_b)  f32   1.0 iff row belongs to that group
    p_mask_ref : (tile_rows, tile_b)  f32   1.0 iff row is the group's positive
    out_ref    : (1, 1, 128)          f32   partial loss (broadcast over lanes)
    """
    # ---- similarity MLP (single lane-dense K = 4E = 128 MXU matmul) ---------
    h = jnp.dot(feat_ref[...], w0t_ref[...],
                preferred_element_type=jnp.float32)              # (rows, H)
    h = jnp.maximum(h + b0_ref[...], 0.0)                        # ReLU (f32 VPU)
    # W1 projection as VPU multiply + lane reduction (no 1-output-row matmul).
    s = jnp.sum(h * w1_ref[...], axis=1, keepdims=True)          # (rows, 1)
    sim = s + bias_ref[...]                                      # (rows, 1)

    # ---- per-group softmax over the T targets + NLL of the positive --------
    # Matmul-free: broadcast the score column along lanes against the static
    # {0,1} group / positive masks and reduce over sublanes.  The per-group
    # max makes exp() underflow-proof even if score scales diverge per row.
    g_mask = g_mask_ref[...]                                     # (rows, tb)
    p_mask = p_mask_ref[...]                                     # (rows, tb)
    scores = jnp.where(g_mask > 0.5, sim, -jnp.inf)              # (rows, tb)
    m_g = jnp.max(scores, axis=0, keepdims=True)                 # (1, tb)
    e = jnp.exp(scores - m_g)                                    # masked -> 0
    denom = jnp.sum(e, axis=0, keepdims=True)                    # (1, tb)
    num = jnp.sum(e * p_mask, axis=0, keepdims=True)             # (1, tb)

    p_pos = num * pl.reciprocal(denom, approx=True)              # softmax[:, 0]
    loss = -jnp.log(p_pos + 1e-6)                                # (1, tb)
    total = jnp.sum(loss, axis=1, keepdims=True)                 # (1, 1)
    # lane-dense partial-loss store for this batch tile
    out_ref[...] = jnp.broadcast_to(total, out_ref.shape)


def sgns_loss_pallas(sub_users, tvecs, bias, w0, b0, w1, b1, tile_b=None):
    """sub_users/tvecs: (B, T, E); bias: (B, T). Returns scalar loss."""
    B, T, E = sub_users.shape
    H = w0.shape[0]
    if tile_b is None:
        tile_b = B                       # whole batch in one grid step
    assert B % tile_b == 0
    n_tiles = B // tile_b
    rows = B * T
    tile_rows = tile_b * T
    if n_tiles > 1:
        # bf16 feat blocks need sublane (16-row) alignment once they are not
        # the full array; this also keeps the MXU M-dim reasonably filled.
        assert tile_rows % 16 == 0, (
            "pick tile_b so tile_b * T is a multiple of 16 (e.g. tile_b = 16)")

    su = sub_users.reshape(rows, E).astype(jnp.float32)
    tv = tvecs.reshape(rows, E).astype(jnp.float32)
    # torch: t.cat([su, tv, su*tv, (su-tv).abs()], dim=2) -> lane-contiguous
    # slab assembled here so XLA fuses it with the elementwise ops.
    feat = jnp.concatenate([su, tv, su * tv, jnp.abs(su - tv)],
                           axis=-1).astype(jnp.bfloat16)         # (rows, 4E)
    w0t = jnp.transpose(w0).astype(jnp.bfloat16)                 # (4E, H)
    b0r = b0.reshape(1, H).astype(jnp.float32)
    w1r = w1.reshape(1, H).astype(jnp.float32)
    # fold scalar W1 bias into the per-target b_l_j bias column
    bias_col = (bias.reshape(rows, 1) + b1.reshape(1, 1)).astype(jnp.float32)

    # Static per-tile indicator masks (hoisted out of the kernel; identical for
    # every tile since each tile holds tile_b complete groups of T rows).
    r = jnp.arange(tile_rows)
    grp = r // T
    cols = jnp.arange(tile_b)
    in_grp = grp[:, None] == cols[None, :]                       # (rows, tb)
    g_mask = in_grp.astype(jnp.float32)
    p_mask = (in_grp & ((r % T) == 0)[:, None]).astype(jnp.float32)

    partials = pl.pallas_call(
        _sgns_loss_kernel,
        out_shape=jax.ShapeDtypeStruct((n_tiles, 1, 128), jnp.float32),
        grid=(n_tiles,),
        in_specs=[
            pl.BlockSpec((tile_rows, 4 * E), lambda i: (i, 0)),
            pl.BlockSpec((tile_rows, 1), lambda i: (i, 0)),
            pl.BlockSpec((4 * E, H), lambda i: (0, 0)),      # VMEM-resident weights
            pl.BlockSpec((1, H), lambda i: (0, 0)),
            pl.BlockSpec((1, H), lambda i: (0, 0)),
            pl.BlockSpec((tile_rows, tile_b), lambda i: (0, 0)),   # static masks
            pl.BlockSpec((tile_rows, tile_b), lambda i: (0, 0)),
        ],
        out_specs=pl.BlockSpec((1, 1, 128), lambda i: (i, 0, 0)),
        compiler_params=pltpu.CompilerParams(
            dimension_semantics=("parallel",)),   # >=2 tiles -> both v7x TCs
    )(feat, bias_col, w0t, b0r, w1r, g_mask, p_mask)
    return jnp.sum(partials[:, 0, 0])


# ------------------------- synthetic ai2v (plain-JAX glue) -------------------
def init_params(key):
    ks = jax.random.split(key, 10)
    s = 0.1
    return dict(
        tvectors=jax.random.normal(ks[0], (VOCAB, EMB), jnp.float32) * s,
        cvectors=jax.random.normal(ks[1], (VOCAB, EMB), jnp.float32) * s,
        Bt_w=jax.random.normal(ks[2], (EMB, EMB), jnp.float32) * s,   # Linear(E,E)
        Bt_b=jnp.zeros((EMB,), jnp.float32),
        Bc_w=jax.random.normal(ks[3], (EMB, EMB), jnp.float32) * s,   # Linear(E,E)
        Bc_b=jnp.zeros((EMB,), jnp.float32),
        W0_w=jax.random.normal(ks[4], (HID, 4 * EMB), jnp.float32) * s,  # Linear(4E,H)
        W0_b=jax.random.normal(ks[5], (HID,), jnp.float32) * s,
        W1_w=jax.random.normal(ks[6], (1, HID), jnp.float32) * s,        # Linear(H,1)
        W1_b=jax.random.normal(ks[7], (1,), jnp.float32) * s,
        b_l_j=jax.random.normal(ks[8], (VOCAB,), jnp.float32) * s,
    )


def ai2v_apply(params, batch_titems, batch_citems, mask_pad_ids=None):
    """Attentive sub-user vectors, one per target item: (B, T, E)."""
    cvecs = params["cvectors"][batch_citems]                       # (B, C, E)
    cvecs = cvecs @ params["Bc_w"].T + params["Bc_b"]              # (B, C, E)
    tq = params["tvectors"][batch_titems]                          # (B, T, E)
    scores = jnp.einsum("bte,bce->btc", tq, cvecs) / jnp.sqrt(EMB)
    if mask_pad_ids is not None:
        scores = jnp.where(mask_pad_ids[:, None, :], -1e9, scores)
    attn = jax.nn.softmax(scores, axis=-1)
    return jnp.einsum("btc,bce->bte", attn, cvecs)                 # (B, T, E)


def forward_t(params, items):
    return params["tvectors"][items]


# ------------------------------ SGNS.forward ---------------------------------
def sgns_prepare(params, batch_titems, batch_citems, mask_pad_ids, neg_key):
    """Negative sampling + ai2v glue; returns (sub_users, tvecs, bias)."""
    B = batch_titems.shape[0]
    # weights=None branch: uniform negative sampling in [0, vocab_size - 1)
    batch_nitems = jax.random.randint(neg_key, (B, N_NEGS), 0, VOCAB - 1)
    titems = jnp.concatenate([batch_titems.reshape(-1, 1), batch_nitems],
                             axis=1)                               # (B, T)
    sub_users = ai2v_apply(params, titems, batch_citems, mask_pad_ids)  # (B,T,E)
    tvecs = forward_t(params, titems) @ params["Bt_w"].T + params["Bt_b"]
    bias = params["b_l_j"][titems]                                      # (B, T)
    return sub_users, tvecs, bias


def sgns_forward(params, batch_titems, batch_citems, mask_pad_ids, neg_key,
                 tile_b=None):
    su, tv, bias = sgns_prepare(params, batch_titems, batch_citems,
                                mask_pad_ids, neg_key)
    return sgns_loss_pallas(su, tv, bias,
                            params["W0_w"], params["W0_b"],
                            params["W1_w"], params["W1_b"], tile_b=tile_b)


# -------------------------- plain-JAX reference ------------------------------
def sgns_loss_ref(sub_users, tvecs, bias, w0, b0, w1, b1):
    feat = jnp.concatenate(
        [sub_users, tvecs, sub_users * tvecs, jnp.abs(sub_users - tvecs)],
        axis=2)                                                    # (B, T, 4E)
    h = jax.nn.relu(jnp.einsum("bti,hi->bth", feat, w0) + b0)
    s = jnp.einsum("bth,oh->bto", h, w1) + b1                      # (B, T, 1)
    sim = s + bias[:, :, None]
    soft = jax.nn.softmax(sim, axis=1) + 1e-6
    return -jnp.sum(jnp.log(soft[:, 0]))


if __name__ == "__main__":
    root = jax.random.PRNGKey(0)
    keys = jax.random.split(root, 7)
    params = init_params(keys[0])

    loss_fn = jax.jit(sgns_loss_pallas, static_argnames=("tile_b",))

    # ---------------- run 1: B=2, single tile (22 rows) ----------------------
    bt = jax.random.randint(keys[1], (BATCH,), 0, VOCAB)             # (B,)
    bc = jax.random.randint(keys[2], (BATCH, CTX), 0, VOCAB)         # (B, C)
    su, tv, bias = sgns_prepare(params, bt, bc, None, keys[3])
    loss = jax.block_until_ready(
        loss_fn(su, tv, bias, params["W0_w"], params["W0_b"],
                params["W1_w"], params["W1_b"], tile_b=None))
    loss_ref = sgns_loss_ref(su, tv, bias, params["W0_w"], params["W0_b"],
                             params["W1_w"], params["W1_b"])
    assert np.isfinite(float(loss))
    np.testing.assert_allclose(float(loss), float(loss_ref), rtol=2e-2, atol=2e-2)

    # ------- run 2: B=32, tile_b=16 -> 2-tile "parallel" grid (176 rows/tile) -
    B2 = 32
    bt2 = jax.random.randint(keys[4], (B2,), 0, VOCAB)
    bc2 = jax.random.randint(keys[5], (B2, CTX), 0, VOCAB)
    su2, tv2, bias2 = sgns_prepare(params, bt2, bc2, None, keys[6])
    loss2 = jax.block_until_ready(
        loss_fn(su2, tv2, bias2, params["W0_w"], params["W0_b"],
                params["W1_w"], params["W1_b"], tile_b=16))
    loss2_ref = sgns_loss_ref(su2, tv2, bias2, params["W0_w"], params["W0_b"],
                              params["W1_w"], params["W1_b"])
    assert np.isfinite(float(loss2))
    np.testing.assert_allclose(float(loss2), float(loss2_ref), rtol=2e-2, atol=2e-2)

    print("KERNEL_OK")
</pallas_src>

<mosaic_0001>
module attributes {stable_mosaic.version = 11 : i64} {
  func.func @_sgns_loss_kernel(%arg0: i32, %arg1: memref<22x128xbf16, #tpu.memory_space<vmem>>, %arg2: memref<22x1xf32, #tpu.memory_space<vmem>>, %arg3: memref<128x32xbf16, #tpu.memory_space<vmem>>, %arg4: memref<1x32xf32, #tpu.memory_space<vmem>>, %arg5: memref<1x32xf32, #tpu.memory_space<vmem>>, %arg6: memref<22x2xf32, #tpu.memory_space<vmem>>, %arg7: memref<22x2xf32, #tpu.memory_space<vmem>>, %arg8: memref<1x1x128xf32, #tpu.memory_space<vmem>>) attributes {dimension_semantics = [#tpu.dimension_semantics<parallel>], iteration_bounds = array<i64: 1>, scalar_prefetch = 0 : i64, scratch_operands = 0 : i64, tpu.core_type = #tpu.core_type<tc>, window_params = [{transform_indices = @transform_0, window_bounds = array<i64: 22, 128>}, {transform_indices = @transform_1, window_bounds = array<i64: 22, 1>}, {pipeline_mode = #tpu.pipeline_mode<synchronous>, transform_indices = @transform_2, window_bounds = array<i64: 128, 32>}, {pipeline_mode = #tpu.pipeline_mode<synchronous>, transform_indices = @transform_3, window_bounds = array<i64: 1, 32>}, {pipeline_mode = #tpu.pipeline_mode<synchronous>, transform_indices = @transform_4, window_bounds = array<i64: 1, 32>}, {pipeline_mode = #tpu.pipeline_mode<synchronous>, transform_indices = @transform_5, window_bounds = array<i64: 22, 2>}, {pipeline_mode = #tpu.pipeline_mode<synchronous>, transform_indices = @transform_6, window_bounds = array<i64: 22, 2>}, {transform_indices = @transform_7, window_bounds = array<i64: 1, 1, 128>}]} {
    %c0 = arith.constant 0 : index
    %c0_0 = arith.constant 0 : index
    %0 = vector.load %arg1[%c0, %c0_0] : memref<22x128xbf16, #tpu.memory_space<vmem>>, vector<22x128xbf16>
    %c0_1 = arith.constant 0 : index
    %c0_2 = arith.constant 0 : index
    %1 = vector.load %arg3[%c0_1, %c0_2] : memref<128x32xbf16, #tpu.memory_space<vmem>>, vector<128x32xbf16>
    %cst = arith.constant dense<0.000000e+00> : vector<22x32xf32>
    %2 = tpu.matmul %0, %1, %cst {dimension_numbers = #tpu.dot_dimension_numbers<[1], [0], [0], [1], [0, 0, 1, 1], [], []>} : vector<22x128xbf16>, vector<128x32xbf16>, vector<22x32xf32> -> vector<22x32xf32>
    %c0_3 = arith.constant 0 : index
    %c0_4 = arith.constant 0 : index
    %3 = vector.load %arg4[%c0_3, %c0_4] : memref<1x32xf32, #tpu.memory_space<vmem>>, vector<1x32xf32>
    %4 = vector.broadcast %3 : vector<1x32xf32> to vector<22x32xf32>
    %5 = arith.addf %2, %4 : vector<22x32xf32>
    %cst_5 = arith.constant 0.000000e+00 : f32
    %6 = vector.broadcast %cst_5 : f32 to vector<22x32xf32>
    %7 = arith.maximumf %5, %6 : vector<22x32xf32>
    %c0_6 = arith.constant 0 : index
    %c0_7 = arith.constant 0 : index
    %8 = vector.load %arg5[%c0_6, %c0_7] : memref<1x32xf32, #tpu.memory_space<vmem>>, vector<1x32xf32>
    %9 = vector.broadcast %8 : vector<1x32xf32> to vector<22x32xf32>
    %10 = arith.mulf %7, %9 : vector<22x32xf32>
    %cst_8 = arith.constant dense<0.000000e+00> : vector<22xf32>
    %11 = vector.multi_reduction <add>, %10, %cst_8 [1] : vector<22x32xf32> to vector<22xf32>
    %12 = vector.shape_cast %11 : vector<22xf32> to vector<22x1xf32>
    %c0_9 = arith.constant 0 : index
    %c0_10 = arith.constant 0 : index
    %13 = vector.load %arg2[%c0_9, %c0_10] : memref<22x1xf32, #tpu.memory_space<vmem>>, vector<22x1xf32>
    %14 = arith.addf %12, %13 : vector<22x1xf32>
    %c0_11 = arith.constant 0 : index
    %c0_12 = arith.constant 0 : index
    %15 = vector.load %arg6[%c0_11, %c0_12] : memref<22x2xf32, #tpu.memory_space<vmem>>, vector<22x2xf32>
    %c0_13 = arith.constant 0 : index
    %c0_14 = arith.constant 0 : index
    %16 = vector.load %arg7[%c0_13, %c0_14] : memref<22x2xf32, #tpu.memory_space<vmem>>, vector<22x2xf32>
    %cst_15 = arith.constant 5.000000e-01 : f32
    %17 = vector.broadcast %cst_15 : f32 to vector<22x2xf32>
    %18 = arith.cmpf ogt, %15, %17 : vector<22x2xf32>
    %cst_16 = arith.constant 0xFF800000 : f32
    %19 = vector.shape_cast %14 : vector<22x1xf32> to vector<22x1xf32>
    %20 = vector.broadcast %19 : vector<22x1xf32> to vector<22x2xf32>
    %21 = vector.broadcast %cst_16 : f32 to vector<22x2xf32>
    %22 = arith.select %18, %20, %21 : vector<22x2xi1>, vector<22x2xf32>
    %cst_17 = arith.constant dense<0xFF800000> : vector<2xf32>
    %23 = vector.multi_reduction <maximumf>, %22, %cst_17 [0] : vector<22x2xf32> to vector<2xf32>
    %24 = vector.shape_cast %23 : vector<2xf32> to vector<1x2xf32>
    %25 = vector.broadcast %24 : vector<1x2xf32> to vector<22x2xf32>
    %26 = arith.subf %22, %25 : vector<22x2xf32>
    %27 = math.exp %26 : vector<22x2xf32>
    %cst_18 = arith.constant dense<0.000000e+00> : vector<2xf32>
    %28 = vector.multi_reduction <add>, %27, %cst_18 [0] : vector<22x2xf32> to vector<2xf32>
    %29 = vector.shape_cast %28 : vector<2xf32> to vector<1x2xf32>
    %30 = arith.mulf %27, %16 : vector<22x2xf32>
    %cst_19 = arith.constant dense<0.000000e+00> : vector<2xf32>
    %31 = vector.multi_reduction <add>, %30, %cst_19 [0] : vector<22x2xf32> to vector<2xf32>
    %32 = vector.shape_cast %31 : vector<2xf32> to vector<1x2xf32>
    %33 = tpu.reciprocal %29 {approx = true} : vector<1x2xf32> -> vector<1x2xf32>
    %34 = arith.mulf %32, %33 : vector<1x2xf32>
    %cst_20 = arith.constant 9.99999997E-7 : f32
    %35 = vector.broadcast %cst_20 : f32 to vector<1x2xf32>
    %36 = arith.addf %34, %35 : vector<1x2xf32>
    %37 = math.log %36 : vector<1x2xf32>
    %cst_21 = arith.constant 0.000000e+00 : f32
    %38 = vector.broadcast %cst_21 : f32 to vector<1x2xf32>
    %39 = arith.subf %38, %37 : vector<1x2xf32>
    %cst_22 = arith.constant dense<0.000000e+00> : vector<1xf32>
    %40 = vector.multi_reduction <add>, %39, %cst_22 [1] : vector<1x2xf32> to vector<1xf32>
    %41 = vector.shape_cast %40 : vector<1xf32> to vector<1x1xf32>
    %42 = vector.shape_cast %41 : vector<1x1xf32> to vector<1x1x1xf32>
    %43 = vector.broadcast %42 : vector<1x1x1xf32> to vector<1x1x128xf32>
    %c0_23 = arith.constant 0 : index
    %c0_24 = arith.constant 0 : index
    %c0_25 = arith.constant 0 : index
    %44 = vector.load %arg8[%c0_23, %c0_24, %c0_25] : memref<1x1x128xf32, #tpu.memory_space<vmem>>, vector<1x1x128xf32>
    tpu.vector_store %arg8[%c0_23, %c0_24, %c0_25], %43 {strides = array<i32>} : memref<1x1x128xf32, #tpu.memory_space<vmem>>, vector<1x1x128xf32>,
    return
  }
  func.func @transform_0(%arg0: i32) -> (i32, i32) {
    %c0_i32 = arith.constant 0 : i32
    %c0_i32_0 = arith.constant 0 : i32
    return %arg0, %c0_i32 : i32, i32
  }
  func.func @transform_1(%arg0: i32) -> (i32, i32) {
    %c0_i32 = arith.constant 0 : i32
    %c0_i32_0 = arith.constant 0 : i32
    return %arg0, %c0_i32 : i32, i32
  }
  func.func @transform_2(%arg0: i32) -> (i32, i32) {
    %c0_i32 = arith.constant 0 : i32
    %c0_i32_0 = arith.constant 0 : i32
    %c0_i32_1 = arith.constant 0 : i32
    return %c0_i32, %c0_i32_0 : i32, i32
  }
  func.func @transform_3(%arg0: i32) -> (i32, i32) {
    %c0_i32 = arith.constant 0 : i32
    %c0_i32_0 = arith.constant 0 : i32
    %c0_i32_1 = arith.constant 0 : i32
    return %c0_i32, %c0_i32_0 : i32, i32
  }
  func.func @transform_4(%arg0: i32) -> (i32, i32) {
    %c0_i32 = arith.constant 0 : i32
    %c0_i32_0 = arith.constant 0 : i32
    %c0_i32_1 = arith.constant 0 : i32
    return %c0_i32, %c0_i32_0 : i32, i32
  }
  func.func @transform_5(%arg0: i32) -> (i32, i32) {
    %c0_i32 = arith.constant 0 : i32
    %c0_i32_0 = arith.constant 0 : i32
    %c0_i32_1 = arith.constant 0 : i32
    return %c0_i32, %c0_i32_0 : i32, i32
  }
  func.func @transform_6(%arg0: i32) -> (i32, i32) {
    %c0_i32 = arith.constant 0 : i32
    %c0_i32_0 = arith.constant 0 : i32
    %c0_i32_1 = arith.constant 0 : i32
    return %c0_i32, %c0_i32_0 : i32, i32
  }
  func.func @transform_7(%arg0: i32) -> (i32, i32, i32) {
    %c0_i32 = arith.constant 0 : i32
    %c0_i32_0 = arith.constant 0 : i32
    %c0_i32_1 = arith.constant 0 : i32
    return %arg0, %c0_i32, %c0_i32_0 : i32, i32, i32
  }
}

</mosaic_0001>

<llo_original>
// kernel: sgns_loss_pallas.1
$region0: #{sgns_loss_pallas.1}
  #allocation0 [shape = 'u32[]', space=smem, size = 0x4, offset = 0x4, fixed_abs, tag = 'smem constant byte address 0x4 - core index']
  #allocation1 [shape = 'u32[72,128]{1,0:T(1,128)}', space=vmem, size = 0x9000, scoped, tag = 'internal scratch']
  %s0 = inlined_call_operand.vmem [shape: bf16[22,128], index: 0, kind: input, shape index: {}]
  %s1 = inlined_call_operand.vmem [shape: f32[22,1], index: 1, kind: input, shape index: {}]
  %s2 = inlined_call_operand.vmem [shape: bf16[128,32], index: 2, kind: input, shape index: {}]
  %s3 = inlined_call_operand.vmem [shape: f32[1,32], index: 3, kind: input, shape index: {}]
  %s4 = inlined_call_operand.vmem [shape: f32[1,32], index: 4, kind: input, shape index: {}]
  %s5 = inlined_call_operand.vmem [shape: f32[22,2], index: 5, kind: input, shape index: {}]
  %s6 = inlined_call_operand.vmem [shape: f32[22,2], index: 6, kind: input, shape index: {}]
  %s7 = inlined_call_operand.hbm [shape: f32[1,1,128], index: 7, kind: output, shape index: {}]
  %s8 = sld [smem:[#allocation0]]
  $region38: #{sgns_loss_pallas.1} parent=0
    _
  %s10 = ssub.s32 1, %s8
  %s11 = scalar_select 0, %s10, %s8
  $region1: #{sgns_loss_pallas.1} parent=0
    #allocation2 [shape = 'u8[512]{0}', space=vmem, size = 0x400, scoped, tag = 'output window, operand 0, single buffered']
    #allocation3 [shape = 's32[1]{0}', space=sflag, size = 0x4, scoped, tag = 'scoped memory for sgns_loss_pallas.1']
    %12 = vsyncpa [#allocation3], 0
    // Predicated region
    $region2: #{sgns_loss_pallas.1} parent=1 // pred_check
      _
    $region3: #{sgns_loss_pallas.1} parent=1 // pred_check_branch
      %14 = sbr.rel (0) target = $region5
    $region4: #{sgns_loss_pallas.1} parent=1 // pred_region
      _
    $region5: #{sgns_loss_pallas.1} parent=1 // pred_fallthru
      _
    // Predicated region
    $region6: #{sgns_loss_pallas.1} parent=1 // pred_check
      _
    $region7: #{sgns_loss_pallas.1} parent=1 // pred_check_branch
      %16 = sbr.rel (0) target = $region9
    $region8: #{sgns_loss_pallas.1} parent=1 // pred_region
      _
    $region9: #{sgns_loss_pallas.1} parent=1 // pred_fallthru
      _
    // Predicated region
    $region10: #{sgns_loss_pallas.1} parent=1 // pred_check
      _
    $region11: #{sgns_loss_pallas.1} parent=1 // pred_check_branch
      %18 = sbr.rel (0) target = $region13
    $region12: #{sgns_loss_pallas.1} parent=1 // pred_region
      _
    $region13: #{sgns_loss_pallas.1} parent=1 // pred_fallthru
      _
    // Predicated region
    $region14: #{sgns_loss_pallas.1} parent=1 // pred_check
      _
    $region15: #{sgns_loss_pallas.1} parent=1 // pred_check_branch
      %20 = sbr.rel (0) target = $region17
    $region16: #{sgns_loss_pallas.1} parent=1 // pred_region
      _
    $region17: #{sgns_loss_pallas.1} parent=1 // pred_fallthru
      _
    // Predicated region
    $region18: #{sgns_loss_pallas.1} parent=1 // pred_check
      _
    $region19: #{sgns_loss_pallas.1} parent=1 // pred_check_branch
      %22 = sbr.rel (0) target = $region21
    $region20: #{sgns_loss_pallas.1} parent=1 // pred_region
      _
    $region21: #{sgns_loss_pallas.1} parent=1 // pred_fallthru
      _
    // Predicated region
    $region22: #{sgns_loss_pallas.1} parent=1 // pred_check
      _
    $region23: #{sgns_loss_pallas.1} parent=1 // pred_check_branch
      %24 = sbr.rel (0) target = $region25
    $region24: #{sgns_loss_pallas.1} parent=1 // pred_region
      _
    $region25: #{sgns_loss_pallas.1} parent=1 // pred_fallthru
      _
    // Predicated region
    $region26: #{sgns_loss_pallas.1} parent=1 // pred_check
      _
    $region27: #{sgns_loss_pallas.1} parent=1 // pred_check_branch
      %26 = sbr.rel (0) target = $region29
    $region28: #{sgns_loss_pallas.1} parent=1 // pred_region
      _
    $region29: #{sgns_loss_pallas.1} parent=1 // pred_fallthru
      _
    %v27 = vld [vmem:[%s0] sm:$0xf]
    %v28 = vld [vmem:[%s0 + $0x4] sm:$0xf]
    %v29 = vld [vmem:[%s0 + $0x8] sm:$0x7]
    %v30 = vld [vmem:[%s2] sm:$0xf]
    %v31 = vld [vmem:[%s2 + $0x4] sm:$0xf]
    %v32 = vld [vmem:[%s2 + $0x8] sm:$0xf]
    %v33 = vld [vmem:[%s2 + $0xc] sm:$0xf]
    %v34 = vld [vmem:[%s2 + $0x10] sm:$0xf]
    %v35 = vld [vmem:[%s2 + $0x14] sm:$0xf]
    %v36 = vld [vmem:[%s2 + $0x18] sm:$0xf]
    %v37 = vld [vmem:[%s2 + $0x1c] sm:$0xf]
    %v38 = vld [vmem:[%s2 + $0x20] sm:$0xf]
    %v39 = vld [vmem:[%s2 + $0x24] sm:$0xf]
    %v40 = vld [vmem:[%s2 + $0x28] sm:$0xf]
    %v41 = vld [vmem:[%s2 + $0x2c] sm:$0xf]
    %v42 = vld [vmem:[%s2 + $0x30] sm:$0xf]
    %v43 = vld [vmem:[%s2 + $0x34] sm:$0xf]
    %v44 = vld [vmem:[%s2 + $0x38] sm:$0xf]
    %v45 = vld [vmem:[%s2 + $0x3c] sm:$0xf]
    %v46 = vld [vmem:[%s3] sm:$0x1]
    %v48 = vperm.slane %v46, 0
    %v53 = vunpack.c.l.b16 %v27
    %v54 = vunpack.c.l.b16 %v28
    %v55 = vunpack.c.l.b16 %v29
    %v56 = vpack.c.b16 %v54, %v53
    %v57 = vpack.c.b16 %v55, %v55
    %v76 = vunpack.c.l.b16 %v30
    %v77 = vunpack.c.l.b16 %v31
    %v78 = vunpack.c.l.b16 %v32
    %v79 = vunpack.c.l.b16 %v33
    %v80 = vunpack.c.l.b16 %v34
    %v81 = vunpack.c.l.b16 %v35
    %v82 = vunpack.c.l.b16 %v36
    %v83 = vunpack.c.l.b16 %v37
    %v84 = vunpack.c.l.b16 %v38
    %v85 = vunpack.c.l.b16 %v39
    %v86 = vunpack.c.l.b16 %v40
    %v87 = vunpack.c.l.b16 %v41
    %v88 = vunpack.c.l.b16 %v42
    %v89 = vunpack.c.l.b16 %v43
    %v90 = vunpack.c.l.b16 %v44
    %v91 = vunpack.c.l.b16 %v45
    %v92 = vpack.c.b16 %v77, %v76
    %v93 = vpack.c.b16 %v79, %v78
    %v94 = vpack.c.b16 %v81, %v80
    %v95 = vpack.c.b16 %v83, %v82
    %v96 = vpack.c.b16 %v85, %v84
    %v97 = vpack.c.b16 %v87, %v86
    %v98 = vpack.c.b16 %v89, %v88
    %v99 = vpack.c.b16 %v91, %v90
    %108 = vmatpush.bf16.msra.mxu0 %v99
    %109 = vmatpush.bf16.msra.mxu0 %v98
    %110 = vmatpush.bf16.msra.mxu0 %v97
    %111 = vmatpush.bf16.msra.mxu0 %v96
    %112 = vmatpush.bf16.msra.mxu0 %v95
    %113 = vmatpush.bf16.msra.mxu0 %v94
    %114 = vmatpush.bf16.msra.mxu0 %v93
    %115 = vmatpush.bf16.msra.mxu0 %v92
    %116 = vmatmul.bf16.gmra.mxu0 %v56
    %v117 = vpop.f32.mrf.mxu0
    %v118 = vadd.f32 %v48, %v117
    %v119 = vpop.f32.mrf.mxu0
    %v120 = vadd.f32 %v48, %v119
    %121 = vmatmul.bf16.gmra.mxu0 %v57
    %v122 = vpop.f32.mrf.mxu0
    %v123 = vadd.f32 %v48, %v122
    %v124 = vpop.f32.mrf.mxu0
    %125 = vdwg.mxu0
    %v126 = vmax.f32 %v118, 0.0
    %v127 = vmax.f32 %v120, 0.0
    %v128 = vmax.f32 %v123, 0.0
    %v129 = vld [vmem:[%s4] sm:$0x1]
    %v131 = vperm.slane %v129, 0
    %v133 = vmul.f32 %v126, %v131
    %v134 = vmul.f32 %v127, %v131
    %v135 = vmul.f32 %v128, %v131
    %vm136 = vcmask 261120
    %v137 = vsel %vm136, %v133, 0.0
    %138 = vadd.xlane.f32.xlu0 %v137
    %v139 = vpop.xlane.xlu0 %138
    %v140 = vsel %vm136, %v134, 0.0
    %141 = vadd.xlane.f32.xlu0 %v140
    %v142 = vpop.xlane.xlu0 %141
    %vm143 = vcmask 259072
    %v144 = vsel %vm143, %v135, 0.0
    %145 = vadd.xlane.f32.xlu0 %v144
    %v146 = vpop.xlane.xlu0 %145
    %v147 = vld [vmem:[%s1] sm:$0xff]
    %v148 = vld [vmem:[%s1 + $0x8] sm:$0xff]
    %v149 = vld [vmem:[%s1 + $0x10] sm:$0x3f]
    %v150 = vadd.f32 %v139, %v147
    %v151 = vadd.f32 %v142, %v148
    %v152 = vadd.f32 %v146, %v149
    %v153 = vld [vmem:[%s5] sm:$0xff]
    %v154 = vld [vmem:[%s5 + $0x8] sm:$0xff]
    %v155 = vld [vmem:[%s5 + $0x10] sm:$0x3f]
    %v156 = vld [vmem:[%s6] sm:$0xff]
    %v157 = vld [vmem:[%s6 + $0x8] sm:$0xff]
    %v158 = vld [vmem:[%s6 + $0x10] sm:$0x3f]
    %vm159 = vcmp.gt.f32.partialorder %v153, 0.5
    %vm160 = vcmp.gt.f32.partialorder %v154, 0.5
    %vm161 = vcmp.gt.f32.partialorder %v155, 0.5
    %163 = vset.pattern.permute.xlu0 0
    %164 = vperm.xlu0 %163, %v150
    %v165 = vpop.permute.xlu0 %164
    %168 = vset.pattern.permute.xlu0 0
    %169 = vperm.xlu0 %168, %v151
    %v170 = vpop.permute.xlu0 %169
    %173 = vset.pattern.permute.xlu0 0
    %174 = vperm.xlu0 %173, %v152
    %v175 = vpop.permute.xlu0 %174
    %v177 = vsel %vm159, %v165, -inf
    %v178 = vsel %vm160, %v170, -inf
    %v179 = vsel %vm161, %v175, -inf
    %vm180 = vcmask 15360
    %v181 = vsel %vm180, %v177, -inf
    %v182 = vsel %vm180, %v178, -inf
    %vm183 = vcmask 13312
    %v184 = vsel %vm183, %v179, -inf
    %v185 = vmax.f32 %v181, %v182
    %v186 = vmax.f32 %v185, %v184
    %v187 = vrot.slane %v186, 4
    %v188 = vmax.f32 %v186, %v187
    %v189 = vrot.slane %v188, 2
    %v190 = vmax.f32 %v188, %v189
    %v191 = vrot.slane %v190, 1
    %v192 = vmax.f32 %v190, %v191
    %v193 = vsub.f32 %v177, %v192
    %v194 = vsub.f32 %v178, %v192
    %v195 = vsub.f32 %v179, %v192
    %v196 = vmul.f32 %v193, 1.442695
    %v197 = vpow.pop %v196
    %v198 = vmul.f32 %v194, 1.442695
    %v199 = vpow.pop %v198
    %v200 = vmul.f32 %v195, 1.442695
    %v201 = vpow.pop %v200
    %v202 = vsel %vm180, %v197, 0.0
    %v203 = vsel %vm180, %v199, 0.0
    %v204 = vadd.f32 %v202, %v203
    %v205 = vsel %vm183, %v201, 0.0
    %v206 = vadd.f32 %v204, %v205
    %v207 = vrot.slane %v206, 4
    %v208 = vadd.f32 %v206, %v207
    %v209 = vrot.slane %v208, 2
    %v210 = vadd.f32 %v208, %v209
    %v211 = vrot.slane %v210, 1
    %v212 = vadd.f32 %v210, %v211
    %v213 = vmul.f32 %v197, %v156
    %v214 = vmul.f32 %v199, %v157
    %v215 = vmul.f32 %v201, %v158
    %v216 = vsel %vm180, %v213, 0.0
    %v217 = vsel %vm180, %v214, 0.0
    %v218 = vadd.f32 %v216, %v217
    %v219 = vsel %vm183, %v215, 0.0
    %v220 = vadd.f32 %v218, %v219
    %v221 = vrot.slane %v220, 4
    %v222 = vadd.f32 %v220, %v221
    %v223 = vrot.slane %v222, 2
    %v224 = vadd.f32 %v222, %v223
    %v225 = vrot.slane %v224, 1
    %v226 = vadd.f32 %v224, %v225
    %v227 = vrcp.pop %v212
    %v228 = vmul.f32 %v226, %v227
    %v229 = vadd.f32 %v228, 1e-06
    %v230 = vlog2.pop %v229
    %v231 = vmul.f32 %v230, 0.6931472
    %v232 = vsub.f32 0.0, %v231
    %v233 = vsel %vm180, %v232, 0.0
    %234 = vadd.xlane.f32.xlu0 %v233
    %v235 = vpop.xlane.xlu0 %234
    %236 = vst [vmem:[#allocation2] sm:$0x1] %v235
    // Predicated region
    $region30: #{sgns_loss_pallas.1} parent=1 // pred_check
      _
    $region31: #{sgns_loss_pallas.1} parent=1 // pred_check_branch
      %238 = sbr.rel (0) target = $region33
    $region32: #{sgns_loss_pallas.1} parent=1 // pred_region
      %240 = vsyncadd [#allocation3], 0
      %s242 = sshll.u32 [#allocation2], 4
      %s243 = int_to_ptr.vmem [resolvable:$true] %s242
      %s244 = sshll.u32 %s7, 4
      %s245 = int_to_ptr.hbm [resolvable:$true] %s244
      %247 = dma.vmem_to_hbm [thread:$0]  %s243, 16, %s245, [#allocation3]
    $region33: #{sgns_loss_pallas.1} parent=1 // pred_fallthru
      _
    // Predicated region
    $region34: #{sgns_loss_pallas.1} parent=1 // pred_check
      _
    $region35: #{sgns_loss_pallas.1} parent=1 // pred_check_branch
      %249 = sbr.rel (0) target = $region37
    $region36: #{sgns_loss_pallas.1} parent=1 // pred_region
      %251 = dma.done [#allocation3], 16
    $region37: #{sgns_loss_pallas.1} parent=1 // pred_fallthru
      _
    %252 = vsyncpa [#allocation3], 1

</llo_original>
